<compile_context>
chip_gen: v7x
topology: tpu7x:2x2x1
jax: 0.10.0
libtpu: 0.0.40
codegen_flags: <defaults>
</compile_context>

<pallas_src>
import functools

import jax
import jax.numpy as jnp
from jax import lax
from jax.experimental import pallas as pl
from jax.experimental.pallas import tpu as pltpu

LANE = 128
SUB = 8


def _round_up(x, m):
    return (x + m - 1) // m * m


def _indrnn_layer_kernel(x_ref, w_ref, b_ref, u_ref, y_ref, h_sc, *, unroll):
    c = pl.program_id(2)                       # time-chunk index (innermost, sequential)

    @pl.when(c == 0)
    def _():                                   # h0 = zeros (module registers a zero buffer)
        h_sc[...] = jnp.zeros_like(h_sc)

    T, bb, in_pad = x_ref.shape
    hb = w_ref.shape[1]

    # Hoisted, chunked input projection on the MXU (bias folded in), written directly
    # into the output tile -- no staging scratch, one full-tile store per chunk.
    x2d = x_ref[...].reshape(T * bb, in_pad)
    lin = jnp.dot(x2d, w_ref[...], preferred_element_type=jnp.float32) + b_ref[...]
    y_ref[...] = lin.reshape(T, bb, hb).astype(y_ref.dtype)

    # Recurrent weight strip: keep it (1, hb); the multiply broadcasts (no full
    # (bb, hb) materialization -> less vreg pressure).
    u = u_ref[...]

    # Serial elementwise recurrence (1 mul + 1 add + 1 max per step), in-place on y_ref;
    # carry h stays f32 regardless of the activation dtype.
    def step(t, h):
        h = jnp.maximum(y_ref[t].astype(jnp.float32) + u * h, 0.0)
        y_ref[t] = h.astype(y_ref.dtype)
        return h

    h_sc[...] = lax.fori_loop(0, T, step, h_sc[...], unroll=unroll)


def _indrnn_layer(xp, wp, bp, up, *, chunk, bb, hb, out_dtype, vmem_limit_bytes):
    """One IndRNN layer on padded tensors.
       xp: (seq_pad, batch_pad, in_pad) -> (seq_pad, batch_pad, hidden_pad)."""
    seq_pad, batch_pad, in_pad = xp.shape
    hidden_pad = wp.shape[1]
    grid = (batch_pad // bb, hidden_pad // hb, seq_pad // chunk)

    kernel = functools.partial(_indrnn_layer_kernel, unroll=max(1, min(8, chunk)))
    return pl.pallas_call(
        kernel,
        out_shape=jax.ShapeDtypeStruct((seq_pad, batch_pad, hidden_pad), out_dtype),
        grid_spec=pltpu.PrefetchScalarGridSpec(
            num_scalar_prefetch=0,
            grid=grid,
            in_specs=[
                # x chunk: double-buffered (default) so the DMA hides behind the recurrence.
                pl.BlockSpec((chunk, bb, in_pad), lambda b, h, c: (c, b, 0)),
                # Grid-invariant (per hidden strip) operands: single-buffered.
                pl.BlockSpec((in_pad, hb), lambda b, h, c: (0, h),
                             pipeline_mode=pl.Buffered(1)),
                pl.BlockSpec((1, hb), lambda b, h, c: (0, h),
                             pipeline_mode=pl.Buffered(1)),
                pl.BlockSpec((1, hb), lambda b, h, c: (0, h),
                             pipeline_mode=pl.Buffered(1)),
            ],
            out_specs=pl.BlockSpec((chunk, bb, hb), lambda b, h, c: (c, b, h)),
            scratch_shapes=[pltpu.VMEM((bb, hb), jnp.float32)],     # hidden-state carry
        ),
        compiler_params=pltpu.CompilerParams(
            dimension_semantics=("parallel", "parallel", "arbitrary"),
            vmem_limit_bytes=vmem_limit_bytes),
    )(xp, wp, bp, up)


def _pick_hidden_block(hidden_pad, bb, n_batch_blocks):
    """Choose the hidden strip width: multiple of 128 dividing hidden_pad, keeping the
    per-step live state small and exposing >=2 parallel blocks when batch gives one."""
    n128 = hidden_pad // LANE
    cands = [LANE * k for k in range(1, n128 + 1) if n128 % k == 0]
    best = cands[0]
    for hb in cands:
        n_hidden_blocks = hidden_pad // hb
        if bb * hb > 32 * 1024:                      # cap live f32 carry (~128 KiB)
            continue
        if n_batch_blocks == 1 and n_hidden_blocks < 2 and len(cands) > 1:
            continue                                 # keep v7x's 2nd TC busy if possible
        best = max(best, hb)
    return best


def init_indrnn_params(key, input_size, hidden_size, n_layer):
    """Mirrors the PyTorch module: Conv1d(k=1) weight ~ N(0, 0.01), bias = 0, recurrent = 1."""
    params = []
    for i in range(n_layer):
        in_size = input_size if i == 0 else hidden_size
        key, sub = jax.random.split(key)
        w = (0.01 * jax.random.normal(sub, (hidden_size, in_size), jnp.float32)).T  # (in, hid)
        b = jnp.zeros((1, hidden_size), jnp.float32)
        u = jnp.ones((1, hidden_size), jnp.float32)
        params.append((w, b, u))
    return params


def indrnn_v2_forward(x, params, hidden_size, *, chunk=32, use_bf16=False):
    """Matches IndRNNv2.forward (batch_first=False, unidirectional, relu, no batch_norm).
       x: (seq, batch, input_size) -> (output (seq, batch, hidden), h_n (batch, hidden*n_layer))."""
    seq, batch, input_size = x.shape
    in_dtype = x.dtype
    act_dtype = jnp.bfloat16 if use_bf16 else jnp.float32
    itemsize = jnp.dtype(act_dtype).itemsize

    hidden_pad = _round_up(hidden_size, LANE)
    in_pad0 = _round_up(input_size, LANE)

    batch_pad = _round_up(batch, SUB)
    if batch_pad > 128:                # split large batches into parallel 128-row blocks
        batch_pad = _round_up(batch_pad, 128)
        bb = 128
    else:
        bb = batch_pad
    n_batch_blocks = batch_pad // bb

    hb = _pick_hidden_block(hidden_pad, bb, n_batch_blocks)

    # Time-chunk selection under a v7x-safe (~48 MiB) live-buffer budget.
    in_pad_max = max(in_pad0, hidden_pad)

    def _live_bytes(t, in_pad):
        x_b = 2 * t * bb * in_pad * itemsize           # double-buffered input chunk
        y_b = 2 * t * bb * hb * itemsize               # double-buffered output chunk
        w_b = in_pad * hb * itemsize                   # Buffered(1) weight strip
        misc = 2 * hb * 4 + bb * hb * 4                # bias + u + h carry
        return x_b + y_b + w_b + misc

    T = max(1, min(seq, chunk))
    BUDGET = 48 * 1024 * 1024
    while T > 8 and _live_bytes(T, in_pad_max) > BUDGET:
        T = max(8, T // 2)
    seq_pad = _round_up(seq, T)

    def _vmem_limit(in_pad):
        need = _live_bytes(T, in_pad)
        return int(min(max(need * 5 // 4 + (4 << 20), 16 << 20), 64 << 20))

    # Zero-pad input to lane/sublane-dense, chunk-aligned shape; cast once in the wrapper.
    xp = jnp.zeros((seq_pad, batch_pad, in_pad0), act_dtype)
    xp = xp.at[:seq, :batch, :input_size].set(x.astype(act_dtype))

    hiddens = []
    cur = xp
    for (w, b, u) in params:
        in_size = w.shape[0]
        in_pad = cur.shape[-1]
        wp = jnp.zeros((in_pad, hidden_pad), act_dtype)
        wp = wp.at[:in_size, :hidden_size].set(w.astype(act_dtype))
        bp = jnp.zeros((1, hidden_pad), jnp.float32).at[:, :hidden_size].set(b)
        up = jnp.zeros((1, hidden_pad), jnp.float32).at[:, :hidden_size].set(u)
        cur = _indrnn_layer(cur, wp, bp, up, chunk=T, bb=bb, hb=hb,
                            out_dtype=act_dtype, vmem_limit_bytes=_vmem_limit(in_pad))
        hiddens.append(cur[seq - 1, :batch, :hidden_size].astype(in_dtype))

    y = cur[:seq, :batch, :hidden_size].astype(in_dtype)
    h_n = jnp.concatenate(hiddens, axis=-1)
    return y, h_n


def indrnn_v2_reference(x, params, hidden_size):
    """Pure-JAX reference for correctness checking."""
    hiddens = []
    for (w, b, u) in params:
        seq, batch, _ = x.shape
        h = jnp.zeros((batch, hidden_size), x.dtype)
        lin = jnp.einsum('sbi,ih->sbh', x, w) + b
        outs = []
        for t in range(seq):
            h = jnp.maximum(lin[t] + u * h, 0.0)
            outs.append(h)
        x = jnp.stack(outs, 0)
        hiddens.append(h)
    return x, jnp.concatenate(hiddens, axis=-1)


if __name__ == "__main__":
    seq, batch, input_size, hidden_size, n_layer = 8, 4, 16, 32, 2

    key = jax.random.PRNGKey(0)
    key, kx = jax.random.split(key)
    x = jax.random.normal(kx, (seq, batch, input_size), jnp.float32)
    params = init_indrnn_params(key, input_size, hidden_size, n_layer)

    out, h_n = indrnn_v2_forward(x, params, hidden_size)
    out = jax.block_until_ready(out)
    h_n = jax.block_until_ready(h_n)

    ref_out, ref_hn = indrnn_v2_reference(x, params, hidden_size)
    assert out.shape == (seq, batch, hidden_size)
    assert h_n.shape == (batch, hidden_size * n_layer)
    assert jnp.allclose(out, ref_out, atol=1e-5, rtol=1e-5)
    assert jnp.allclose(h_n, ref_hn, atol=1e-5, rtol=1e-5)

    print("KERNEL_OK")
</pallas_src>

<mosaic_0001>
module attributes {stable_mosaic.version = 11 : i64} {
  func.func @_indrnn_layer_kernel(%arg0: i32, %arg1: i32, %arg2: i32, %arg3: memref<8x8x128xf32, #tpu.memory_space<vmem>>, %arg4: memref<128x128xf32, #tpu.memory_space<vmem>>, %arg5: memref<1x128xf32, #tpu.memory_space<vmem>>, %arg6: memref<1x128xf32, #tpu.memory_space<vmem>>, %arg7: memref<8x8x128xf32, #tpu.memory_space<vmem>>, %arg8: memref<8x128xf32, #tpu.memory_space<vmem>>) attributes {dimension_semantics = [#tpu.dimension_semantics<parallel>, #tpu.dimension_semantics<parallel>, #tpu.dimension_semantics<arbitrary>], iteration_bounds = array<i64: 1, 1, 1>, scalar_prefetch = 0 : i64, scratch_operands = 1 : i64, tpu.core_type = #tpu.core_type<tc>, window_params = [{transform_indices = @transform_0, window_bounds = array<i64: 8, 8, 128>}, {pipeline_mode = #tpu.pipeline_mode<synchronous>, transform_indices = @transform_1, window_bounds = array<i64: 128, 128>}, {pipeline_mode = #tpu.pipeline_mode<synchronous>, transform_indices = @transform_2, window_bounds = array<i64: 1, 128>}, {pipeline_mode = #tpu.pipeline_mode<synchronous>, transform_indices = @transform_3, window_bounds = array<i64: 1, 128>}, {transform_indices = @transform_4, window_bounds = array<i64: 8, 8, 128>}]} {
    %c0_i32 = arith.constant 0 : i32
    %0 = arith.cmpi eq, %arg2, %c0_i32 : i32
    %1 = arith.extui %0 : i1 to i32
    %c0_i32_0 = arith.constant 0 : i32
    %2 = arith.cmpi ne, %1, %c0_i32_0 : i32
    scf.if %2 {
      %cst_57 = arith.constant 0.000000e+00 : f32
      %111 = vector.broadcast %cst_57 : f32 to vector<8x128xf32>
      %c0_58 = arith.constant 0 : index
      %c0_59 = arith.constant 0 : index
      %112 = vector.load %arg8[%c0_58, %c0_59] : memref<8x128xf32, #tpu.memory_space<vmem>>, vector<8x128xf32>
      tpu.vector_store %arg8[%c0_58, %c0_59], %111 {strides = array<i32>} : memref<8x128xf32, #tpu.memory_space<vmem>>, vector<8x128xf32>,
    } else {
    }
    %c0 = arith.constant 0 : index
    %c0_1 = arith.constant 0 : index
    %c0_2 = arith.constant 0 : index
    %3 = vector.load %arg3[%c0, %c0_1, %c0_2] : memref<8x8x128xf32, #tpu.memory_space<vmem>>, vector<8x8x128xf32>
    %4 = vector.shape_cast %3 : vector<8x8x128xf32> to vector<64x128xf32>
    %c0_3 = arith.constant 0 : index
    %c0_4 = arith.constant 0 : index
    %5 = vector.load %arg4[%c0_3, %c0_4] : memref<128x128xf32, #tpu.memory_space<vmem>>, vector<128x128xf32>
    %cst = arith.constant dense<0.000000e+00> : vector<64x128xf32>
    %6 = tpu.matmul %4, %5, %cst {dimension_numbers = #tpu.dot_dimension_numbers<[1], [0], [0], [1], [0, 0, 1, 1], [], []>} : vector<64x128xf32>, vector<128x128xf32>, vector<64x128xf32> -> vector<64x128xf32>
    %c0_5 = arith.constant 0 : index
    %c0_6 = arith.constant 0 : index
    %7 = vector.load %arg5[%c0_5, %c0_6] : memref<1x128xf32, #tpu.memory_space<vmem>>, vector<1x128xf32>
    %8 = vector.broadcast %7 : vector<1x128xf32> to vector<64x128xf32>
    %9 = arith.addf %6, %8 : vector<64x128xf32>
    %10 = vector.shape_cast %9 : vector<64x128xf32> to vector<8x8x128xf32>
    %c0_7 = arith.constant 0 : index
    %c0_8 = arith.constant 0 : index
    %c0_9 = arith.constant 0 : index
    %11 = vector.load %arg7[%c0_7, %c0_8, %c0_9] : memref<8x8x128xf32, #tpu.memory_space<vmem>>, vector<8x8x128xf32>
    tpu.vector_store %arg7[%c0_7, %c0_8, %c0_9], %10 {strides = array<i32>} : memref<8x8x128xf32, #tpu.memory_space<vmem>>, vector<8x8x128xf32>,
    %c0_10 = arith.constant 0 : index
    %c0_11 = arith.constant 0 : index
    %12 = vector.load %arg6[%c0_10, %c0_11] : memref<1x128xf32, #tpu.memory_space<vmem>>, vector<1x128xf32>
    %c0_12 = arith.constant 0 : index
    %c0_13 = arith.constant 0 : index
    %13 = vector.load %arg8[%c0_12, %c0_13] : memref<8x128xf32, #tpu.memory_space<vmem>>, vector<8x128xf32>
    %c0_i32_14 = arith.constant 0 : i32
    %14 = arith.index_cast %c0_i32_14 : i32 to index
    %c0_15 = arith.constant 0 : index
    %c0_16 = arith.constant 0 : index
    %15 = vector.load %arg7[%14, %c0_15, %c0_16] : memref<8x8x128xf32, #tpu.memory_space<vmem>>, vector<1x8x128xf32>
    %16 = vector.shape_cast %15 : vector<1x8x128xf32> to vector<8x128xf32>
    %17 = vector.broadcast %12 : vector<1x128xf32> to vector<8x128xf32>
    %18 = arith.mulf %17, %13 : vector<8x128xf32>
    %19 = arith.addf %16, %18 : vector<8x128xf32>
    %cst_17 = arith.constant 0.000000e+00 : f32
    %20 = vector.broadcast %cst_17 : f32 to vector<8x128xf32>
    %21 = arith.maximumf %19, %20 : vector<8x128xf32>
    %22 = arith.index_cast %c0_i32_14 : i32 to index
    %c0_18 = arith.constant 0 : index
    %c0_19 = arith.constant 0 : index
    %23 = vector.load %arg7[%22, %c0_18, %c0_19] : memref<8x8x128xf32, #tpu.memory_space<vmem>>, vector<1x8x128xf32>
    %24 = vector.shape_cast %23 : vector<1x8x128xf32> to vector<8x128xf32>
    %25 = vector.shape_cast %21 : vector<8x128xf32> to vector<1x8x128xf32>
    tpu.vector_store %arg7[%22, %c0_18, %c0_19], %25 {strides = array<i32>} : memref<8x8x128xf32, #tpu.memory_space<vmem>>, vector<1x8x128xf32>,
    %c1_i32 = arith.constant 1 : i32
    %26 = arith.index_cast %c1_i32 : i32 to index
    %c0_20 = arith.constant 0 : index
    %c0_21 = arith.constant 0 : index
    %27 = vector.load %arg7[%26, %c0_20, %c0_21] : memref<8x8x128xf32, #tpu.memory_space<vmem>>, vector<1x8x128xf32>
    %28 = vector.shape_cast %27 : vector<1x8x128xf32> to vector<8x128xf32>
    %29 = vector.broadcast %12 : vector<1x128xf32> to vector<8x128xf32>
    %30 = arith.mulf %29, %21 : vector<8x128xf32>
    %31 = arith.addf %28, %30 : vector<8x128xf32>
    %cst_22 = arith.constant 0.000000e+00 : f32
    %32 = vector.broadcast %cst_22 : f32 to vector<8x128xf32>
    %33 = arith.maximumf %31, %32 : vector<8x128xf32>
    %34 = arith.index_cast %c1_i32 : i32 to index
    %c0_23 = arith.constant 0 : index
    %c0_24 = arith.constant 0 : index
    %35 = vector.load %arg7[%34, %c0_23, %c0_24] : memref<8x8x128xf32, #tpu.memory_space<vmem>>, vector<1x8x128xf32>
    %36 = vector.shape_cast %35 : vector<1x8x128xf32> to vector<8x128xf32>
    %37 = vector.shape_cast %33 : vector<8x128xf32> to vector<1x8x128xf32>
    tpu.vector_store %arg7[%34, %c0_23, %c0_24], %37 {strides = array<i32>} : memref<8x8x128xf32, #tpu.memory_space<vmem>>, vector<1x8x128xf32>,
    %c2_i32 = arith.constant 2 : i32
    %38 = arith.index_cast %c2_i32 : i32 to index
    %c0_25 = arith.constant 0 : index
    %c0_26 = arith.constant 0 : index
    %39 = vector.load %arg7[%38, %c0_25, %c0_26] : memref<8x8x128xf32, #tpu.memory_space<vmem>>, vector<1x8x128xf32>
    %40 = vector.shape_cast %39 : vector<1x8x128xf32> to vector<8x128xf32>
    %41 = vector.broadcast %12 : vector<1x128xf32> to vector<8x128xf32>
    %42 = arith.mulf %41, %33 : vector<8x128xf32>
    %43 = arith.addf %40, %42 : vector<8x128xf32>
    %cst_27 = arith.constant 0.000000e+00 : f32
    %44 = vector.broadcast %cst_27 : f32 to vector<8x128xf32>
    %45 = arith.maximumf %43, %44 : vector<8x128xf32>
    %46 = arith.index_cast %c2_i32 : i32 to index
    %c0_28 = arith.constant 0 : index
    %c0_29 = arith.constant 0 : index
    %47 = vector.load %arg7[%46, %c0_28, %c0_29] : memref<8x8x128xf32, #tpu.memory_space<vmem>>, vector<1x8x128xf32>
    %48 = vector.shape_cast %47 : vector<1x8x128xf32> to vector<8x128xf32>
    %49 = vector.shape_cast %45 : vector<8x128xf32> to vector<1x8x128xf32>
    tpu.vector_store %arg7[%46, %c0_28, %c0_29], %49 {strides = array<i32>} : memref<8x8x128xf32, #tpu.memory_space<vmem>>, vector<1x8x128xf32>,
    %c3_i32 = arith.constant 3 : i32
    %50 = arith.index_cast %c3_i32 : i32 to index
    %c0_30 = arith.constant 0 : index
    %c0_31 = arith.constant 0 : index
    %51 = vector.load %arg7[%50, %c0_30, %c0_31] : memref<8x8x128xf32, #tpu.memory_space<vmem>>, vector<1x8x128xf32>
    %52 = vector.shape_cast %51 : vector<1x8x128xf32> to vector<8x128xf32>
    %53 = vector.broadcast %12 : vector<1x128xf32> to vector<8x128xf32>
    %54 = arith.mulf %53, %45 : vector<8x128xf32>
    %55 = arith.addf %52, %54 : vector<8x128xf32>
    %cst_32 = arith.constant 0.000000e+00 : f32
    %56 = vector.broadcast %cst_32 : f32 to vector<8x128xf32>
    %57 = arith.maximumf %55, %56 : vector<8x128xf32>
    %58 = arith.index_cast %c3_i32 : i32 to index
    %c0_33 = arith.constant 0 : index
    %c0_34 = arith.constant 0 : index
    %59 = vector.load %arg7[%58, %c0_33, %c0_34] : memref<8x8x128xf32, #tpu.memory_space<vmem>>, vector<1x8x128xf32>
    %60 = vector.shape_cast %59 : vector<1x8x128xf32> to vector<8x128xf32>
    %61 = vector.shape_cast %57 : vector<8x128xf32> to vector<1x8x128xf32>
    tpu.vector_store %arg7[%58, %c0_33, %c0_34], %61 {strides = array<i32>} : memref<8x8x128xf32, #tpu.memory_space<vmem>>, vector<1x8x128xf32>,
    %c4_i32 = arith.constant 4 : i32
    %62 = arith.index_cast %c4_i32 : i32 to index
    %c0_35 = arith.constant 0 : index
    %c0_36 = arith.constant 0 : index
    %63 = vector.load %arg7[%62, %c0_35, %c0_36] : memref<8x8x128xf32, #tpu.memory_space<vmem>>, vector<1x8x128xf32>
    %64 = vector.shape_cast %63 : vector<1x8x128xf32> to vector<8x128xf32>
    %65 = vector.broadcast %12 : vector<1x128xf32> to vector<8x128xf32>
    %66 = arith.mulf %65, %57 : vector<8x128xf32>
    %67 = arith.addf %64, %66 : vector<8x128xf32>
    %cst_37 = arith.constant 0.000000e+00 : f32
    %68 = vector.broadcast %cst_37 : f32 to vector<8x128xf32>
    %69 = arith.maximumf %67, %68 : vector<8x128xf32>
    %70 = arith.index_cast %c4_i32 : i32 to index
    %c0_38 = arith.constant 0 : index
    %c0_39 = arith.constant 0 : index
    %71 = vector.load %arg7[%70, %c0_38, %c0_39] : memref<8x8x128xf32, #tpu.memory_space<vmem>>, vector<1x8x128xf32>
    %72 = vector.shape_cast %71 : vector<1x8x128xf32> to vector<8x128xf32>
    %73 = vector.shape_cast %69 : vector<8x128xf32> to vector<1x8x128xf32>
    tpu.vector_store %arg7[%70, %c0_38, %c0_39], %73 {strides = array<i32>} : memref<8x8x128xf32, #tpu.memory_space<vmem>>, vector<1x8x128xf32>,
    %c5_i32 = arith.constant 5 : i32
    %74 = arith.index_cast %c5_i32 : i32 to index
    %c0_40 = arith.constant 0 : index
    %c0_41 = arith.constant 0 : index
    %75 = vector.load %arg7[%74, %c0_40, %c0_41] : memref<8x8x128xf32, #tpu.memory_space<vmem>>, vector<1x8x128xf32>
    %76 = vector.shape_cast %75 : vector<1x8x128xf32> to vector<8x128xf32>
    %77 = vector.broadcast %12 : vector<1x128xf32> to vector<8x128xf32>
    %78 = arith.mulf %77, %69 : vector<8x128xf32>
    %79 = arith.addf %76, %78 : vector<8x128xf32>
    %cst_42 = arith.constant 0.000000e+00 : f32
    %80 = vector.broadcast %cst_42 : f32 to vector<8x128xf32>
    %81 = arith.maximumf %79, %80 : vector<8x128xf32>
    %82 = arith.index_cast %c5_i32 : i32 to index
    %c0_43 = arith.constant 0 : index
    %c0_44 = arith.constant 0 : index
    %83 = vector.load %arg7[%82, %c0_43, %c0_44] : memref<8x8x128xf32, #tpu.memory_space<vmem>>, vector<1x8x128xf32>
    %84 = vector.shape_cast %83 : vector<1x8x128xf32> to vector<8x128xf32>
    %85 = vector.shape_cast %81 : vector<8x128xf32> to vector<1x8x128xf32>
    tpu.vector_store %arg7[%82, %c0_43, %c0_44], %85 {strides = array<i32>} : memref<8x8x128xf32, #tpu.memory_space<vmem>>, vector<1x8x128xf32>,
    %c6_i32 = arith.constant 6 : i32
    %86 = arith.index_cast %c6_i32 : i32 to index
    %c0_45 = arith.constant 0 : index
    %c0_46 = arith.constant 0 : index
    %87 = vector.load %arg7[%86, %c0_45, %c0_46] : memref<8x8x128xf32, #tpu.memory_space<vmem>>, vector<1x8x128xf32>
    %88 = vector.shape_cast %87 : vector<1x8x128xf32> to vector<8x128xf32>
    %89 = vector.broadcast %12 : vector<1x128xf32> to vector<8x128xf32>
    %90 = arith.mulf %89, %81 : vector<8x128xf32>
    %91 = arith.addf %88, %90 : vector<8x128xf32>
    %cst_47 = arith.constant 0.000000e+00 : f32
    %92 = vector.broadcast %cst_47 : f32 to vector<8x128xf32>
    %93 = arith.maximumf %91, %92 : vector<8x128xf32>
    %94 = arith.index_cast %c6_i32 : i32 to index
    %c0_48 = arith.constant 0 : index
    %c0_49 = arith.constant 0 : index
    %95 = vector.load %arg7[%94, %c0_48, %c0_49] : memref<8x8x128xf32, #tpu.memory_space<vmem>>, vector<1x8x128xf32>
    %96 = vector.shape_cast %95 : vector<1x8x128xf32> to vector<8x128xf32>
    %97 = vector.shape_cast %93 : vector<8x128xf32> to vector<1x8x128xf32>
    tpu.vector_store %arg7[%94, %c0_48, %c0_49], %97 {strides = array<i32>} : memref<8x8x128xf32, #tpu.memory_space<vmem>>, vector<1x8x128xf32>,
    %c7_i32 = arith.constant 7 : i32
    %98 = arith.index_cast %c7_i32 : i32 to index
    %c0_50 = arith.constant 0 : index
    %c0_51 = arith.constant 0 : index
    %99 = vector.load %arg7[%98, %c0_50, %c0_51] : memref<8x8x128xf32, #tpu.memory_space<vmem>>, vector<1x8x128xf32>
    %100 = vector.shape_cast %99 : vector<1x8x128xf32> to vector<8x128xf32>
    %101 = vector.broadcast %12 : vector<1x128xf32> to vector<8x128xf32>
    %102 = arith.mulf %101, %93 : vector<8x128xf32>
    %103 = arith.addf %100, %102 : vector<8x128xf32>
    %cst_52 = arith.constant 0.000000e+00 : f32
    %104 = vector.broadcast %cst_52 : f32 to vector<8x128xf32>
    %105 = arith.maximumf %103, %104 : vector<8x128xf32>
    %106 = arith.index_cast %c7_i32 : i32 to index
    %c0_53 = arith.constant 0 : index
    %c0_54 = arith.constant 0 : index
    %107 = vector.load %arg7[%106, %c0_53, %c0_54] : memref<8x8x128xf32, #tpu.memory_space<vmem>>, vector<1x8x128xf32>
    %108 = vector.shape_cast %107 : vector<1x8x128xf32> to vector<8x128xf32>
    %109 = vector.shape_cast %105 : vector<8x128xf32> to vector<1x8x128xf32>
    tpu.vector_store %arg7[%106, %c0_53, %c0_54], %109 {strides = array<i32>} : memref<8x8x128xf32, #tpu.memory_space<vmem>>, vector<1x8x128xf32>,
    %c8_i32 = arith.constant 8 : i32
    %c0_55 = arith.constant 0 : index
    %c0_56 = arith.constant 0 : index
    %110 = vector.load %arg8[%c0_55, %c0_56] : memref<8x128xf32, #tpu.memory_space<vmem>>, vector<8x128xf32>
    tpu.vector_store %arg8[%c0_55, %c0_56], %105 {strides = array<i32>} : memref<8x128xf32, #tpu.memory_space<vmem>>, vector<8x128xf32>,
    return
  }
  func.func @transform_0(%arg0: i32, %arg1: i32, %arg2: i32) -> (i32, i32, i32) {
    %c0_i32 = arith.constant 0 : i32
    %c0_i32_0 = arith.constant 0 : i32
    return %arg2, %arg0, %c0_i32 : i32, i32, i32
  }
  func.func @transform_1(%arg0: i32, %arg1: i32, %arg2: i32) -> (i32, i32) {
    %c0_i32 = arith.constant 0 : i32
    %c0_i32_0 = arith.constant 0 : i32
    return %c0_i32, %arg1 : i32, i32
  }
  func.func @transform_2(%arg0: i32, %arg1: i32, %arg2: i32) -> (i32, i32) {
    %c0_i32 = arith.constant 0 : i32
    %c0_i32_0 = arith.constant 0 : i32
    return %c0_i32, %arg1 : i32, i32
  }
  func.func @transform_3(%arg0: i32, %arg1: i32, %arg2: i32) -> (i32, i32) {
    %c0_i32 = arith.constant 0 : i32
    %c0_i32_0 = arith.constant 0 : i32
    return %c0_i32, %arg1 : i32, i32
  }
  func.func @transform_4(%arg0: i32, %arg1: i32, %arg2: i32) -> (i32, i32, i32) {
    %c0_i32 = arith.constant 0 : i32
    return %arg2, %arg0, %arg1 : i32, i32, i32
  }
}

</mosaic_0001>

<llo_original>
// kernel: tpu_custom_call.1
$region0: #{tpu_custom_call.1}
  #allocation0 [shape = 'u32[]', space=smem, size = 0x4, offset = 0x4, fixed_abs, tag = 'smem constant byte address 0x4 - core index']
  #allocation1 [shape = 'u32[144,128]{1,0:T(1,128)}', space=vmem, size = 0x12000, scoped, tag = 'internal scratch']
  #allocation2 [shape = 'f32[8,128]{1,0:T(8,128)}', space=vmem, size = 0x1000, scoped, tag = 'scratch operand']
  %s0 = inlined_call_operand.hbm [shape: f32[8,8,128], index: 0, kind: input, shape index: {}]
  %s1 = inlined_call_operand.hbm [shape: f32[128,128], index: 1, kind: input, shape index: {}]
  %s2 = inlined_call_operand.vmem [shape: f32[1,128], index: 2, kind: input, shape index: {}]
  %s3 = inlined_call_operand.vmem [shape: f32[1,128], index: 3, kind: input, shape index: {}]
  %s4 = inlined_call_operand.hbm [shape: f32[8,8,128], index: 4, kind: output, shape index: {}]
  %s5 = sld [smem:[#allocation0]]
  $region38: #{tpu_custom_call.1} parent=0
    _
  %s7 = ssub.s32 1, %s5
  %s8 = scalar_select 0, %s7, %s5
  $region1: #{tpu_custom_call.1} parent=0
    #allocation3 [shape = 'u8[32768]{0}', space=vmem, size = 0x8000, scoped, tag = 'input window, operand 0, single buffered']
    #allocation4 [shape = 's32[1]{0}', space=sflag, size = 0x4, scoped, tag = 'scoped memory for tpu_custom_call.1']
    #allocation5 [shape = 's32[1]{0}', space=sflag, size = 0x4, scoped, tag = 'scoped memory for tpu_custom_call.1']
    #allocation6 [shape = 'u8[65536]{0}', space=vmem, size = 0x10000, scoped, tag = 'input window, operand 1, single buffered']
    #allocation7 [shape = 's32[1]{0}', space=sflag, size = 0x4, scoped, tag = 'scoped memory for tpu_custom_call.1']
    #allocation8 [shape = 'u8[32768]{0}', space=vmem, size = 0x8000, scoped, tag = 'output window, operand 0, single buffered']
    %9 = vsyncpa [#allocation4], 0
    %10 = vsyncpa [#allocation7], 0
    %11 = vsyncpa [#allocation5], 0
    // Predicated region
    $region2: #{tpu_custom_call.1} parent=1 // pred_check
      _
    $region3: #{tpu_custom_call.1} parent=1 // pred_check_branch
      %13 = sbr.rel (0) target = $region5
    $region4: #{tpu_custom_call.1} parent=1 // pred_region
      %s15 = ssub.s32 1024, 1024
      %16 = vsyncadd [#allocation4], %s15
      %s17 = sshll.u32 [#allocation3], 4
      %s18 = int_to_ptr.vmem [resolvable:$true] %s17
      %23 = dma.hbm_to_vmem [thread:$0]  %s0, 1024, %s18, [#allocation4], 128, 128, 8
    $region5: #{tpu_custom_call.1} parent=1 // pred_fallthru
      _
    // Predicated region
    $region6: #{tpu_custom_call.1} parent=1 // pred_check
      _
    $region7: #{tpu_custom_call.1} parent=1 // pred_check_branch
      %25 = sbr.rel (0) target = $region9
    $region8: #{tpu_custom_call.1} parent=1 // pred_region
      %s27 = ssub.s32 2048, 2048
      %28 = vsyncadd [#allocation7], %s27
      %s29 = sshll.u32 [#allocation6], 4
      %s30 = int_to_ptr.vmem [resolvable:$true] %s29
      %35 = dma.hbm_to_vmem [thread:$0]  %s1, 2048, %s30, [#allocation7], 128, 128, 8
    $region9: #{tpu_custom_call.1} parent=1 // pred_fallthru
      _
    // Predicated region
    $region10: #{tpu_custom_call.1} parent=1 // pred_check
      _
    $region11: #{tpu_custom_call.1} parent=1 // pred_check_branch
      %37 = sbr.rel (0) target = $region13
    $region12: #{tpu_custom_call.1} parent=1 // pred_region
      _
    $region13: #{tpu_custom_call.1} parent=1 // pred_fallthru
      _
    // Predicated region
    $region14: #{tpu_custom_call.1} parent=1 // pred_check
      _
    $region15: #{tpu_custom_call.1} parent=1 // pred_check_branch
      %39 = sbr.rel (0) target = $region17
    $region16: #{tpu_custom_call.1} parent=1 // pred_region
      _
    $region17: #{tpu_custom_call.1} parent=1 // pred_fallthru
      _
    // Predicated region
    $region18: #{tpu_custom_call.1} parent=1 // pred_check
      _
    $region19: #{tpu_custom_call.1} parent=1 // pred_check_branch
      %41 = sbr.rel (0) target = $region21
    $region20: #{tpu_custom_call.1} parent=1 // pred_region
      %42 = dma.done [#allocation4], 1024
    $region21: #{tpu_custom_call.1} parent=1 // pred_fallthru
      _
    // Predicated region
    $region22: #{tpu_custom_call.1} parent=1 // pred_check
      _
    $region23: #{tpu_custom_call.1} parent=1 // pred_check_branch
      %44 = sbr.rel (0) target = $region25
    $region24: #{tpu_custom_call.1} parent=1 // pred_region
      %45 = dma.done [#allocation7], 2048
    $region25: #{tpu_custom_call.1} parent=1 // pred_fallthru
      _
    %p46 = scmp.eq.s32.totalorder 0, 0
    // Predicated region
    $region26: #{tpu_custom_call.1} parent=1 // pred_check
      %p47 = pneg %p46
    $region27: #{tpu_custom_call.1} parent=1 // pred_check_branch
      %49 = sbr.rel (%p47) target = $region29
    $region28: #{tpu_custom_call.1} parent=1 // pred_region
      %50 = vst [vmem:[#allocation2] sm:$0xff] 0.0
    $region29: #{tpu_custom_call.1} parent=1 // pred_fallthru
      _
    %v51 = vld [vmem:[#allocation3] sm:$0xff]
    %v52 = vld [vmem:[#allocation3 + $0x8] sm:$0xff]
    %v53 = vld [vmem:[#allocation3 + $0x10] sm:$0xff]
    %v54 = vld [vmem:[#allocation3 + $0x18] sm:$0xff]
    %v55 = vld [vmem:[#allocation3 + $0x20] sm:$0xff]
    %v56 = vld [vmem:[#allocation3 + $0x28] sm:$0xff]
    %v57 = vld [vmem:[#allocation3 + $0x30] sm:$0xff]
    %v58 = vld [vmem:[#allocation3 + $0x38] sm:$0xff]
    %v59 = vld [vmem:[#allocation6] sm:$0xff]
    %v60 = vld [vmem:[#allocation6 + $0x8] sm:$0xff]
    %v61 = vld [vmem:[#allocation6 + $0x10] sm:$0xff]
    %v62 = vld [vmem:[#allocation6 + $0x18] sm:$0xff]
    %v63 = vld [vmem:[#allocation6 + $0x20] sm:$0xff]
    %v64 = vld [vmem:[#allocation6 + $0x28] sm:$0xff]
    %v65 = vld [vmem:[#allocation6 + $0x30] sm:$0xff]
    %v66 = vld [vmem:[#allocation6 + $0x38] sm:$0xff]
    %v67 = vld [vmem:[#allocation6 + $0x40] sm:$0xff]
    %v68 = vld [vmem:[#allocation6 + $0x48] sm:$0xff]
    %v69 = vld [vmem:[#allocation6 + $0x50] sm:$0xff]
    %v70 = vld [vmem:[#allocation6 + $0x58] sm:$0xff]
    %v71 = vld [vmem:[#allocation6 + $0x60] sm:$0xff]
    %v72 = vld [vmem:[#allocation6 + $0x68] sm:$0xff]
    %v73 = vld [vmem:[#allocation6 + $0x70] sm:$0xff]
    %v74 = vld [vmem:[#allocation6 + $0x78] sm:$0xff]
    %v75 = vld [vmem:[%s2] sm:$0x1]
    %v77 = vlaneseq
    %v78 = vshrl.u32 %v77, 7
    %v79 = vsub.s32 0, %v78
    %v80 = vrot.slane %v75, %v79
    %82 = vmatprep.subr.mxu0 0.0
    %83 = vmatpush1.msra.mxu0 %v59
    %84 = vmatprep.subr.mxu0 0.0
    %85 = vmatpush1.msra.mxu0 %v60
    %86 = vmatprep.subr.mxu0 0.0
    %87 = vmatpush1.msra.mxu0 %v61
    %88 = vmatprep.subr.mxu0 0.0
    %89 = vmatpush1.msra.mxu0 %v62
    %90 = vmatprep.subr.mxu0 0.0
    %91 = vmatpush1.msra.mxu0 %v63
    %92 = vmatprep.subr.mxu0 0.0
    %93 = vmatpush1.msra.mxu0 %v64
    %94 = vmatprep.subr.mxu0 0.0
    %95 = vmatpush1.msra.mxu0 %v65
    %96 = vmatprep.subr.mxu0 0.0
    %97 = vmatpush1.msra.mxu0 %v66
    %98 = vmatprep.subr.mxu0 0.0
    %99 = vmatpush1.msra.mxu0 %v67
    %100 = vmatprep.subr.mxu0 0.0
    %101 = vmatpush1.msra.mxu0 %v68
    %102 = vmatprep.subr.mxu0 0.0
    %103 = vmatpush1.msra.mxu0 %v69
    %104 = vmatprep.subr.mxu0 0.0
    %105 = vmatpush1.msra.mxu0 %v70
    %106 = vmatprep.subr.mxu0 0.0
    %107 = vmatpush1.msra.mxu0 %v71
    %108 = vmatprep.subr.mxu0 0.0
    %109 = vmatpush1.msra.mxu0 %v72
    %110 = vmatprep.subr.mxu0 0.0
    %111 = vmatpush1.msra.mxu0 %v73
    %112 = vmatprep.subr.mxu0 0.0
    %113 = vmatpush1.msra.mxu0 %v74
    %114 = vmatprep.subr.mxu0 0.0
    %115 = vmatpush1.msra.mxu0 0.0
    %116 = vmatprep.subr.mxu0 0.0
    %117 = vmatpush1.msra.mxu0 0.0
    %118 = vmatprep.subr.mxu0 0.0
    %119 = vmatpush1.msra.mxu0 0.0
    %120 = vmatprep.subr.mxu0 0.0
    %121 = vmatpush1.msra.mxu0 0.0
    %122 = vmatprep.subr.mxu0 0.0
    %123 = vmatpush1.msra.mxu0 0.0
    %124 = vmatprep.subr.mxu0 0.0
    %125 = vmatpush1.msra.mxu0 0.0
    %126 = vmatprep.subr.mxu0 0.0
    %127 = vmatpush1.msra.mxu0 0.0
    %128 = vmatprep.subr.mxu0 0.0
    %129 = vmatpush1.msra.mxu0 0.0
    %130 = vmatprep.subr.mxu0 0.0
    %131 = vmatpush1.msra.mxu0 0.0
    %132 = vmatprep.subr.mxu0 0.0
    %133 = vmatpush1.msra.mxu0 0.0
    %134 = vmatprep.subr.mxu0 0.0
    %135 = vmatpush1.msra.mxu0 0.0
    %136 = vmatprep.subr.mxu0 0.0
    %137 = vmatpush1.msra.mxu0 0.0
    %138 = vmatprep.subr.mxu0 0.0
    %139 = vmatpush1.msra.mxu0 0.0
    %140 = vmatprep.subr.mxu0 0.0
    %141 = vmatpush1.msra.mxu0 0.0
    %142 = vmatprep.subr.mxu0 0.0
    %143 = vmatpush1.msra.mxu0 0.0
    %144 = vmatprep.subr.mxu0 0.0
    %145 = vmatpush1.msra.mxu0 0.0
    %146 = vmatprep.mubr.f32.mxu0 0.0
    %147 = vmatmul.mubr.f32.gmra.mrb[0].mxu0 %v51
    %v148 = vpop.f32.mrb[0].mxu0
    %v149 = vadd.f32 %v80, %v148
    %v150 = vpop.f32.mrb[0].mxu0
    %151 = vmatprep.mubr.f32.mxu0 0.0
    %152 = vmatmul.mubr.f32.gmra.mrb[0].mxu0 %v52
    %v153 = vpop.f32.mrb[0].mxu0
    %v154 = vadd.f32 %v80, %v153
    %v155 = vpop.f32.mrb[0].mxu0
    %156 = vmatprep.mubr.f32.mxu0 0.0
    %157 = vmatmul.mubr.f32.gmra.mrb[0].mxu0 %v53
    %v158 = vpop.f32.mrb[0].mxu0
    %v159 = vadd.f32 %v80, %v158
    %v160 = vpop.f32.mrb[0].mxu0
    %161 = vmatprep.mubr.f32.mxu0 0.0
    %162 = vmatmul.mubr.f32.gmra.mrb[0].mxu0 %v54
    %v163 = vpop.f32.mrb[0].mxu0
    %v164 = vadd.f32 %v80, %v163
    %v165 = vpop.f32.mrb[0].mxu0
    %166 = vmatprep.mubr.f32.mxu0 0.0
    %167 = vmatmul.mubr.f32.gmra.mrb[0].mxu0 %v55
    %v168 = vpop.f32.mrb[0].mxu0
    %v169 = vadd.f32 %v80, %v168
    %v170 = vpop.f32.mrb[0].mxu0
    %171 = vmatprep.mubr.f32.mxu0 0.0
    %172 = vmatmul.mubr.f32.gmra.mrb[0].mxu0 %v56
    %v173 = vpop.f32.mrb[0].mxu0
    %v174 = vadd.f32 %v80, %v173
    %v175 = vpop.f32.mrb[0].mxu0
    %176 = vmatprep.mubr.f32.mxu0 0.0
    %177 = vmatmul.mubr.f32.gmra.mrb[0].mxu0 %v57
    %v178 = vpop.f32.mrb[0].mxu0
    %v179 = vadd.f32 %v80, %v178
    %v180 = vpop.f32.mrb[0].mxu0
    %181 = vmatprep.mubr.f32.mxu0 0.0
    %182 = vmatmul.mubr.f32.gmra.mrb[0].mxu0 %v58
    %v183 = vpop.f32.mrb[0].mxu0
    %v184 = vadd.f32 %v80, %v183
    %v185 = vpop.f32.mrb[0].mxu0
    %186 = vdwg.mxu0
    %187 = vst [vmem:[#allocation8] sm:$0xff] %v149
    %188 = vst [vmem:[#allocation8 + $0x8] sm:$0xff] %v154
    %189 = vst [vmem:[#allocation8 + $0x10] sm:$0xff] %v159
    %190 = vst [vmem:[#allocation8 + $0x18] sm:$0xff] %v164
    %191 = vst [vmem:[#allocation8 + $0x20] sm:$0xff] %v169
    %192 = vst [vmem:[#allocation8 + $0x28] sm:$0xff] %v174
    %193 = vst [vmem:[#allocation8 + $0x30] sm:$0xff] %v179
    %194 = vst [vmem:[#allocation8 + $0x38] sm:$0xff] %v184
    %v195 = vld [vmem:[%s3] sm:$0x1]
    %v196 = vld [vmem:[#allocation2] sm:$0xff]
    %v197 = vld [vmem:[#allocation8] sm:$0xff]
    %v199 = vlaneseq
    %v200 = vshrl.u32 %v199, 7
    %v201 = vsub.s32 0, %v200
    %v202 = vrot.slane %v195, %v201
    %v204 = vmul.f32 %v202, %v196
    %v205 = vadd.f32 %v197, %v204
    %v206 = vmax.f32 %v205, 0.0
    %207 = vst [vmem:[#allocation8] sm:$0xff] %v206
    %s208 = scalar_lea.vmem [#allocation8], 8
    %v209 = vld [vmem:[%s208] sm:$0xff]
    %v210 = vmul.f32 %v202, %v206
    %v211 = vadd.f32 %v209, %v210
    %v212 = vmax.f32 %v211, 0.0
    %213 = vst [vmem:[%s208] sm:$0xff] %v212
    %s214 = scalar_lea.vmem [#allocation8], 16
    %v215 = vld [vmem:[%s214] sm:$0xff]
    %v216 = vmul.f32 %v202, %v212
    %v217 = vadd.f32 %v215, %v216
    %v218 = vmax.f32 %v217, 0.0
    %219 = vst [vmem:[%s214] sm:$0xff] %v218
    %s220 = scalar_lea.vmem [#allocation8], 24
    %v221 = vld [vmem:[%s220] sm:$0xff]
    %v222 = vmul.f32 %v202, %v218
    %v223 = vadd.f32 %v221, %v222
    %v224 = vmax.f32 %v223, 0.0
    %225 = vst [vmem:[%s220] sm:$0xff] %v224
    %s226 = scalar_lea.vmem [#allocation8], 32
    %v227 = vld [vmem:[%s226] sm:$0xff]
    %v228 = vmul.f32 %v202, %v224
    %v229 = vadd.f32 %v227, %v228
    %v230 = vmax.f32 %v229, 0.0
    %231 = vst [vmem:[%s226] sm:$0xff] %v230
    %s232 = scalar_lea.vmem [#allocation8], 40
    %v233 = vld [vmem:[%s232] sm:$0xff]
    %v234 = vmul.f32 %v202, %v230
    %v235 = vadd.f32 %v233, %v234
    %v236 = vmax.f32 %v235, 0.0
    %237 = vst [vmem:[%s232] sm:$0xff] %v236
    %s238 = scalar_lea.vmem [#allocation8], 48
    %v239 = vld [vmem:[%s238] sm:$0xff]
    %v240 = vmul.f32 %v202, %v236
    %v241 = vadd.f32 %v239, %v240
    %v242 = vmax.f32 %v241, 0.0
    %243 = vst [vmem:[%s238] sm:$0xff] %v242
    %s244 = scalar_lea.vmem [#allocation8], 56
    %v245 = vld [vmem:[%s244] sm:$0xff]
    %v246 = vmul.f32 %v202, %v242
    %v247 = vadd.f32 %v245, %v246
    %v248 = vmax.f32 %v247, 0.0
    %249 = vst [vmem:[%s244] sm:$0xff] %v248
    %250 = vst [vmem:[#allocation2] sm:$0xff] %v248
    // Predicated region
    $region30: #{tpu_custom_call.1} parent=1 // pred_check
      _
    $region31: #{tpu_custom_call.1} parent=1 // pred_check_branch
      %252 = sbr.rel (0) target = $region33
    $region32: #{tpu_custom_call.1} parent=1 // pred_region
      %s254 = ssub.s32 1024, 1024
      %255 = vsyncadd [#allocation5], %s254
      %s256 = sshll.u32 [#allocation8], 4
      %s257 = int_to_ptr.vmem [resolvable:$true] %s256
      %262 = dma.vmem_to_hbm [thread:$0]  %s257, 1024, %s4, [#allocation5], 128, 128, 8
    $region33: #{tpu_custom_call.1} parent=1 // pred_fallthru
      _
    // Predicated region
    $region34: #{tpu_custom_call.1} parent=1 // pred_check
      _
    $region35: #{tpu_custom_call.1} parent=1 // pred_check_branch
      %264 = sbr.rel (0) target = $region37
    $region36: #{tpu_custom_call.1} parent=1 // pred_region
      %265 = dma.done [#allocation5], 1024
    $region37: #{tpu_custom_call.1} parent=1 // pred_fallthru
      _
    %266 = vsyncpa [#allocation4], 1
    %267 = vsyncpa [#allocation7], 1
    %268 = vsyncpa [#allocation5], 1

</llo_original>
